<compile_context>
chip_gen: v5e
topology: v5e:2x2
jax: 0.10.0
libtpu: 0.0.40
codegen_flags: <defaults>
</compile_context>

<pallas_src>
import math

import jax
import jax.numpy as jnp
from jax.experimental import pallas as pl
from jax.experimental.pallas import tpu as pltpu


def jumprelu_kernel(x_ref, logthr_ref, o_ref):
    x = x_ref[...]                                   # (tb, tf)
    # exp on the EUP (free slot in this mem-bound kernel); compare in f32 to
    # match PyTorch, which compares x against the f32 exp(log_threshold).
    thr = jnp.exp(logthr_ref[...].astype(jnp.float32))   # (1, tf)
    mask = x.astype(jnp.float32) > thr               # broadcast over rows
    o_ref[...] = x * mask.astype(x.dtype)            # NaN-propagating mask-mul


def _cdiv(a, b):
    return -(-a // b)


def _round_up(n, m):
    return _cdiv(n, m) * m


def _vmem_budget_bytes():
    """Total double-buffered budget, generation-aware and under default limits."""
    try:
        vmem = pltpu.get_tpu_info().vmem_capacity_bytes
    except Exception:  # pragma: no cover - conservative fallback
        vmem = 128 * 1024 * 1024
    # <=16 MiB total (2x in + 2x out) keeps us inside the default scoped-VMEM
    # limit on v5e/v6e; on v7x (64 MiB VMEM) this scales down to ~8 MiB.
    return min(16 * 1024 * 1024, vmem // 8)


def _choose_tiles(B, F, itemsize, budget_bytes):
    """Pick (tb, tf): ~2-4 MiB lane-dense blocks with plenty of batch steps."""
    # Sublane quantum: 8 rows for 32-bit, 16 for 16-bit, 32 for 8-bit dtypes.
    q = 8 * max(1, 4 // itemsize)
    # Per-block byte target: budget covers 2x input + 2x output buffers.
    per_block = max(q * 128 * itemsize, budget_bytes // 4)

    # Feature tile: prefer the full row (resident threshold, 1-D grid).
    if q * F * itemsize <= per_block:
        tf = F
    else:
        tf = max(128, (per_block // (q * itemsize)) // 128 * 128)
        tf = min(tf, _round_up(F, 128))

    # Batch tile sized to the per-block budget.
    tb = max(q, (per_block // (tf * itemsize)) // q * q)
    tb = min(tb, _round_up(B, q))

    # Keep >= ~8 batch steps (>= 4 per TensorCore on v7x) when there is enough
    # work, so DMA in / compute / DMA out actually overlap.
    desired_steps = 8
    if _cdiv(B, tb) < desired_steps and B > desired_steps * q:
        tb = max(q, _round_up(_cdiv(B, desired_steps), q))
    return tb, tf


def jumprelu(x, log_threshold):
    """x: (..., F) float array, log_threshold: (F,) float array."""
    orig_shape = x.shape
    F = orig_shape[-1]
    x2 = x.reshape(-1, F)
    B = x2.shape[0]

    # Lane-dense folding: if F is not 128-aligned, fold k rows into the lane
    # axis (pure reshape; memory layout unchanged) and tile the threshold k
    # times, so every store is a full unmasked vst.
    logthr2 = log_threshold.reshape(1, F)
    fold_k = 1
    if F % 128 != 0:
        k = 128 // math.gcd(F, 128)          # smallest k with (k * F) % 128 == 0
        if k > 1 and B % k == 0 and B >= k:
            fold_k = k
            x2 = x2.reshape(B // k, k * F)
            logthr2 = jnp.tile(logthr2, (1, k))
    B_eff, F_eff = x2.shape

    itemsize = jnp.dtype(x2.dtype).itemsize
    tb, tf = _choose_tiles(B_eff, F_eff, itemsize, _vmem_budget_bytes())

    if tf == F_eff:
        # Full feature rows: 1-D grid over batch; threshold stays resident.
        grid = (_cdiv(B_eff, tb),)
        in_specs = [
            pl.BlockSpec((tb, tf), lambda i: (i, 0)),
            pl.BlockSpec((1, tf), lambda i: (0, 0)),
        ]
        out_specs = pl.BlockSpec((tb, tf), lambda i: (i, 0))
        dim_sem = ("parallel",)
    else:
        grid = (_cdiv(B_eff, tb), _cdiv(F_eff, tf))
        in_specs = [
            pl.BlockSpec((tb, tf), lambda i, j: (i, j)),
            pl.BlockSpec((1, tf), lambda i, j: (0, j)),
        ]
        out_specs = pl.BlockSpec((tb, tf), lambda i, j: (i, j))
        dim_sem = ("parallel", "parallel")

    out = pl.pallas_call(
        jumprelu_kernel,
        out_shape=jax.ShapeDtypeStruct((B_eff, F_eff), x2.dtype),
        grid_spec=pltpu.PrefetchScalarGridSpec(
            num_scalar_prefetch=0,
            grid=grid,
            in_specs=in_specs,
            out_specs=out_specs,
        ),
        compiler_params=pltpu.CompilerParams(
            dimension_semantics=dim_sem,
        ),
    )(x2, logthr2)

    if fold_k > 1:
        out = out.reshape(B, F)
    return out.reshape(orig_shape)


# TODO(synk): backward pass (straight-through RectangleFunction gradient for the
# threshold) is not implemented; only the forward semantics are provided here.


if __name__ == "__main__":
    key = jax.random.PRNGKey(0)
    batch, feature_size = 16, 256
    bandwidth = 0.001  # only used in backward in the PyTorch module; unused here

    kx, _ = jax.random.split(key)
    x = jax.random.normal(kx, (batch, feature_size), dtype=jnp.float32)
    # Deterministic parameter init, same as nn.Parameter(torch.full((F,), log(0.1)))
    log_threshold = jnp.full((feature_size,), math.log(0.1), dtype=jnp.float32)

    out = jumprelu(x, log_threshold)
    out = jax.block_until_ready(out)

    # Pure-JAX reference check
    ref = x * (x > jnp.exp(log_threshold)[None, :]).astype(x.dtype)
    assert out.shape == (batch, feature_size)
    assert jnp.allclose(out, ref), "mismatch vs reference"

    # Also exercise a non-128-aligned feature size (lane-dense fold path).
    f2 = 64
    x_small = jax.random.normal(key, (8, f2), dtype=jnp.float32)
    lt_small = jnp.full((f2,), math.log(0.1), dtype=jnp.float32)
    out_small = jax.block_until_ready(jumprelu(x_small, lt_small))
    ref_small = x_small * (x_small > jnp.exp(lt_small)[None, :]).astype(x_small.dtype)
    assert jnp.allclose(out_small, ref_small), "mismatch vs reference (folded path)"

    print("KERNEL_OK")
</pallas_src>

<mosaic_0001>
module attributes {stable_mosaic.version = 11 : i64} {
  func.func @jumprelu_kernel(%arg0: i32, %arg1: memref<16x256xf32, #tpu.memory_space<vmem>>, %arg2: memref<1x256xf32, #tpu.memory_space<vmem>>, %arg3: memref<16x256xf32, #tpu.memory_space<vmem>>) attributes {dimension_semantics = [#tpu.dimension_semantics<parallel>], iteration_bounds = array<i64: 1>, scalar_prefetch = 0 : i64, scratch_operands = 0 : i64, tpu.core_type = #tpu.core_type<tc>, window_params = [{transform_indices = @transform_0, window_bounds = array<i64: 16, 256>}, {pipeline_mode = #tpu.pipeline_mode<synchronous>, transform_indices = @transform_1, window_bounds = array<i64: 1, 256>}, {transform_indices = @transform_2, window_bounds = array<i64: 16, 256>}]} {
    %c0 = arith.constant 0 : index
    %c0_0 = arith.constant 0 : index
    %0 = vector.load %arg1[%c0, %c0_0] : memref<16x256xf32, #tpu.memory_space<vmem>>, vector<16x256xf32>
    %c0_1 = arith.constant 0 : index
    %c0_2 = arith.constant 0 : index
    %1 = vector.load %arg2[%c0_1, %c0_2] : memref<1x256xf32, #tpu.memory_space<vmem>>, vector<1x256xf32>
    %2 = math.exp %1 : vector<1x256xf32>
    %3 = vector.broadcast %2 : vector<1x256xf32> to vector<16x256xf32>
    %4 = arith.cmpf ogt, %0, %3 : vector<16x256xf32>
    %5 = arith.extui %4 : vector<16x256xi1> to vector<16x256xi32>
    %6 = arith.sitofp %5 : vector<16x256xi32> to vector<16x256xf32>
    %7 = arith.mulf %0, %6 : vector<16x256xf32>
    %c0_3 = arith.constant 0 : index
    %c0_4 = arith.constant 0 : index
    %8 = vector.load %arg3[%c0_3, %c0_4] : memref<16x256xf32, #tpu.memory_space<vmem>>, vector<16x256xf32>
    tpu.vector_store %arg3[%c0_3, %c0_4], %7 {strides = array<i32>} : memref<16x256xf32, #tpu.memory_space<vmem>>, vector<16x256xf32>,
    return
  }
  func.func @transform_0(%arg0: i32) -> (i32, i32) {
    %c0_i32 = arith.constant 0 : i32
    %c0_i32_0 = arith.constant 0 : i32
    return %arg0, %c0_i32 : i32, i32
  }
  func.func @transform_1(%arg0: i32) -> (i32, i32) {
    %c0_i32 = arith.constant 0 : i32
    %c0_i32_0 = arith.constant 0 : i32
    %c0_i32_1 = arith.constant 0 : i32
    return %c0_i32, %c0_i32_0 : i32, i32
  }
  func.func @transform_2(%arg0: i32) -> (i32, i32) {
    %c0_i32 = arith.constant 0 : i32
    %c0_i32_0 = arith.constant 0 : i32
    return %arg0, %c0_i32 : i32, i32
  }
}

</mosaic_0001>

<llo_original>
// kernel: tpu_custom_call.1
$region0: #{tpu_custom_call.1}
  #allocation0 [shape = 'u32[]', space=smem, size = 0x4, offset = 0x4, fixed_abs, tag = 'smem constant byte address 0x4 - core index']
  #allocation1 [shape = 'u32[72,128]{1,0:T(1,128)}', space=vmem, size = 0x9000, scoped, tag = 'internal scratch']
  %s0 = inlined_call_operand.hbm [shape: f32[16,256], index: 0, kind: input, shape index: {}]
  %s1 = inlined_call_operand.hbm [shape: f32[1,256], index: 1, kind: input, shape index: {}]
  %s2 = inlined_call_operand.hbm [shape: f32[16,256], index: 2, kind: output, shape index: {}]
  %s3 = sld [smem:[#allocation0]]
  $region26: #{tpu_custom_call.1} parent=0
    _
  %s5 = ssub.s32 1, %s3
  %s6 = scalar_select 0, %s5, %s3
  $region1: #{tpu_custom_call.1} parent=0
    #allocation2 [shape = 'u8[16384]{0}', space=vmem, size = 0x4000, scoped, tag = 'input window, operand 0, single buffered']
    #allocation3 [shape = 's32[1]{0}', space=sflag, size = 0x4, scoped, tag = 'scoped memory for tpu_custom_call.1']
    #allocation4 [shape = 's32[1]{0}', space=sflag, size = 0x4, scoped, tag = 'scoped memory for tpu_custom_call.1']
    #allocation5 [shape = 'u8[1024]{0}', space=vmem, size = 0x400, scoped, tag = 'input window, operand 1, single buffered']
    #allocation6 [shape = 's32[1]{0}', space=sflag, size = 0x4, scoped, tag = 'scoped memory for tpu_custom_call.1']
    #allocation7 [shape = 'u8[16384]{0}', space=vmem, size = 0x4000, scoped, tag = 'output window, operand 0, single buffered']
    %7 = vsyncpa [#allocation3], 0
    %8 = vsyncpa [#allocation6], 0
    %9 = vsyncpa [#allocation4], 0
    // Predicated region
    $region2: #{tpu_custom_call.1} parent=1 // pred_check
      _
    $region3: #{tpu_custom_call.1} parent=1 // pred_check_branch
      %11 = sbr.rel (0) target = $region5
    $region4: #{tpu_custom_call.1} parent=1 // pred_region
      %13 = vsyncadd [#allocation3], 0
      %s14 = sshll.u32 %s0, 4
      %s15 = int_to_ptr.hbm [resolvable:$true] %s14
      %s16 = sshll.u32 [#allocation2], 4
      %s17 = int_to_ptr.vmem [resolvable:$true] %s16
      %22 = dma.hbm_to_vmem [thread:$0]  %s15, 512, %s17, [#allocation3], 256, 256, 16
    $region5: #{tpu_custom_call.1} parent=1 // pred_fallthru
      _
    // Predicated region
    $region6: #{tpu_custom_call.1} parent=1 // pred_check
      _
    $region7: #{tpu_custom_call.1} parent=1 // pred_check_branch
      %24 = sbr.rel (0) target = $region9
    $region8: #{tpu_custom_call.1} parent=1 // pred_region
      %26 = vsyncadd [#allocation6], 0
      %s28 = sshll.u32 %s1, 4
      %s29 = int_to_ptr.hbm [resolvable:$true] %s28
      %s30 = sshll.u32 [#allocation5], 4
      %s31 = int_to_ptr.vmem [resolvable:$true] %s30
      %33 = dma.hbm_to_vmem [thread:$0]  %s29, 32, %s31, [#allocation6]
    $region9: #{tpu_custom_call.1} parent=1 // pred_fallthru
      _
    // Predicated region
    $region10: #{tpu_custom_call.1} parent=1 // pred_check
      _
    $region11: #{tpu_custom_call.1} parent=1 // pred_check_branch
      %35 = sbr.rel (0) target = $region13
    $region12: #{tpu_custom_call.1} parent=1 // pred_region
      %37 = dma.done [#allocation3], 512
    $region13: #{tpu_custom_call.1} parent=1 // pred_fallthru
      _
    // Predicated region
    $region14: #{tpu_custom_call.1} parent=1 // pred_check
      _
    $region15: #{tpu_custom_call.1} parent=1 // pred_check_branch
      %39 = sbr.rel (0) target = $region17
    $region16: #{tpu_custom_call.1} parent=1 // pred_region
      %41 = dma.done [#allocation6], 32
    $region17: #{tpu_custom_call.1} parent=1 // pred_fallthru
      _
    %v42 = vld [vmem:[#allocation2] sm:$0xff]
    %v43 = vld [vmem:[#allocation2 + $0x8] sm:$0xff]
    %v44 = vld [vmem:[#allocation2 + $0x10] sm:$0xff]
    %v45 = vld [vmem:[#allocation2 + $0x18] sm:$0xff]
    %v46 = vld [vmem:[#allocation5] sm:$0x3]
    %v47 = vmul.f32 %v46, 1.442695
    %v48 = vpow.pop %v47
    %v50 = vperm.slane %v48, 0
    %v51 = vperm.slane %v48, 1
    %vm54 = vcmp.gt.f32.partialorder %v42, %v50
    %vm55 = vcmp.gt.f32.partialorder %v43, %v51
    %vm56 = vcmp.gt.f32.partialorder %v44, %v50
    %vm57 = vcmp.gt.f32.partialorder %v45, %v51
    %v58 = vsel %vm54, 1, 0
    %v59 = vsel %vm55, 1, 0
    %v60 = vsel %vm56, 1, 0
    %v61 = vsel %vm57, 1, 0
    %v62 = vcvt.s32.f32 %v58
    %v63 = vcvt.s32.f32 %v59
    %v64 = vcvt.s32.f32 %v60
    %v65 = vcvt.s32.f32 %v61
    %v66 = vmul.f32 %v42, %v62
    %v67 = vmul.f32 %v43, %v63
    %v68 = vmul.f32 %v44, %v64
    %v69 = vmul.f32 %v45, %v65
    %70 = vst [vmem:[#allocation7] sm:$0xff] %v66
    %71 = vst [vmem:[#allocation7 + $0x8] sm:$0xff] %v67
    %72 = vst [vmem:[#allocation7 + $0x10] sm:$0xff] %v68
    %73 = vst [vmem:[#allocation7 + $0x18] sm:$0xff] %v69
    // Predicated region
    $region18: #{tpu_custom_call.1} parent=1 // pred_check
      _
    $region19: #{tpu_custom_call.1} parent=1 // pred_check_branch
      %75 = sbr.rel (0) target = $region21
    $region20: #{tpu_custom_call.1} parent=1 // pred_region
      %77 = vsyncadd [#allocation4], 0
      %s78 = sshll.u32 [#allocation7], 4
      %s79 = int_to_ptr.vmem [resolvable:$true] %s78
      %s80 = sshll.u32 %s2, 4
      %s81 = int_to_ptr.hbm [resolvable:$true] %s80
      %86 = dma.vmem_to_hbm [thread:$0]  %s79, 512, %s81, [#allocation4], 256, 256, 16
    $region21: #{tpu_custom_call.1} parent=1 // pred_fallthru
      _
    // Predicated region
    $region22: #{tpu_custom_call.1} parent=1 // pred_check
      _
    $region23: #{tpu_custom_call.1} parent=1 // pred_check_branch
      %88 = sbr.rel (0) target = $region25
    $region24: #{tpu_custom_call.1} parent=1 // pred_region
      %90 = dma.done [#allocation4], 512
    $region25: #{tpu_custom_call.1} parent=1 // pred_fallthru
      _
    %91 = vsyncpa [#allocation3], 1
    %92 = vsyncpa [#allocation6], 1
    %93 = vsyncpa [#allocation4], 1

</llo_original>
